<compile_context>
chip_gen: v7x
topology: tpu7x:2x2x1
jax: 0.10.0
libtpu: 0.0.40
codegen_flags: <defaults>
</compile_context>

<pallas_src>
import functools
import math

import jax
import jax.numpy as jnp
from jax.experimental import pallas as pl
from jax.experimental.pallas import tpu as pltpu


def _round_up(x, m):
    return ((x + m - 1) // m) * m


def _num_tensorcores():
    """Best-effort TensorCore count for batch-tile gating (falls back to 1)."""
    try:
        info = pltpu.get_tpu_info()
        for name in ("num_tensorcores", "num_cores", "tensorcores_per_chip",
                     "cores_per_chip"):
            v = getattr(info, name, None)
            if v:
                return int(v)
    except Exception:
        pass
    try:
        return int(getattr(jax.devices()[0], "num_cores", 1) or 1)
    except Exception:
        return 1


def _vmem_capacity_bytes():
    try:
        return int(pltpu.get_tpu_info().vmem_capacity_bytes)
    except Exception:
        return 64 * 1024 * 1024   # conservative: v7x per-TC VMEM


def _pick_time_chunk(T, batch_tile, gate_width, vmem_budget):
    """Largest divisor of T whose f32 x-projection scratch fits ~1/8 of the budget."""
    cap = max(1, vmem_budget // (8 * batch_tile * gate_width * 4))
    cap = min(cap, 512, T)   # also bound the unrolled/compiled trip count
    chunk = cap
    while T % chunk:
        chunk -= 1
    return chunk


def _lstm_kernel(x_ref, w_ih_ref, w_hh_ref, b_ref, w_lin_ref, b_lin_ref,
                 out_ref, xproj_ref, h_ref, c_ref,
                 *, chunk, batch_tile, hidden_size, unroll):
    H = hidden_size
    Bt = batch_tile
    t_chunk = pl.program_id(1)

    # PyTorch default h0 = c0 = 0, re-initialized at the start of every batch tile.
    @pl.when(t_chunk == 0)
    def _():
        h_ref[...] = jnp.zeros_like(h_ref)
        c_ref[...] = jnp.zeros_like(c_ref)

    # ---- Phase 1 (off the serial path): hoisted input projection for the whole
    # chunk.  One bf16 MXU matmul, bias (b_ih + b_hh) folded in, f32 accumulate.
    xproj_ref[...] = (
        jnp.dot(x_ref[0], w_ih_ref[...], preferred_element_type=jnp.float32)
        + b_ref[...])                                     # (chunk*Bt, 4H) f32

    # ---- Phase 2: sequential LSTM recurrence over the chunk.  `chunk` divides T
    # exactly (host-side choice) -> static trip count, unrolled for the scheduler.
    def step(s, carry):
        h, c = carry                                      # (Bt, H) float32
        row = pl.multiple_of(s * Bt, 8)                   # aligned sublane start
        gates = xproj_ref[pl.ds(row, Bt), :] + jnp.dot(
            h.astype(jnp.bfloat16), w_hh_ref[...],        # W_hh read in-loop, not
            preferred_element_type=jnp.float32)           # pinned in the vreg file
        # Packed gates (i|f|g|o): ONE sigmoid over the whole packed band.  The g
        # columns of W_ih/W_hh/b were pre-scaled by 2, so tanh(x) = 2*sigmoid(2x) - 1.
        act = jax.nn.sigmoid(gates)                       # 1 EUP vreg / step
        i_g = act[:, 0 * H:1 * H]
        f_g = act[:, 1 * H:2 * H]
        g_g = 2.0 * act[:, 2 * H:3 * H] - 1.0             # tanh via sigmoid (VPU fixup)
        o_g = act[:, 3 * H:4 * H]
        c_new = f_g * c + i_g * g_g
        h_new = o_g * jnp.tanh(c_new)                     # 2nd (sub-)vreg of EUP work
        return h_new, c_new

    h_fin, c_fin = jax.lax.fori_loop(0, chunk, step, (h_ref[...], c_ref[...]),
                                     unroll=unroll)
    h_ref[...] = h_fin
    c_ref[...] = c_fin

    # ---- Final Linear on the last timestep's hidden state (fused, f32).
    @pl.when(t_chunk == pl.num_programs(1) - 1)
    def _():
        out_ref[0] = (
            jnp.dot(h_fin, w_lin_ref[...], preferred_element_type=jnp.float32)
            + b_lin_ref[...]).astype(out_ref.dtype)


def lstm_model_forward(x, packed, *, time_chunk=None):
    """x: (B, T, input_size) float32 -> (B, output_size) float32."""
    B, T, I = x.shape
    H = packed["hidden_size"]
    O = packed["w_lin_t"].shape[1]

    # Batch tiling: the recurrence is latency-bound, so only split the batch when a
    # second TensorCore exists to take the second tile (v7x); otherwise one tile.
    n_btiles = 2 if (B >= 16 and _num_tensorcores() >= 2) else 1
    Bt = _round_up(pl.cdiv(B, n_btiles), 8)               # sublane-aligned batch tile
    B_pad = n_btiles * Bt

    vmem_cap = _vmem_capacity_bytes()
    vmem_budget = (3 * vmem_cap) // 4

    # Time chunk must divide T (padded zero-input steps would corrupt h: gates(0)=bias).
    if time_chunk is None:
        time_chunk = _pick_time_chunk(T, Bt, 4 * H, vmem_budget)
    chunk = time_chunk
    assert T % chunk == 0, "time_chunk must divide T exactly"
    n_chunks = T // chunk
    unroll = chunk if chunk <= 16 else 8

    # Layout plumbing (XLA side): (B, T, I) -> (n_btiles, T*Bt, I), time-major within
    # each batch tile, batch zero-padded, bf16 MXU operand.  No time padding.
    xt = jnp.pad(x, ((0, B_pad - B), (0, 0), (0, 0)))
    xt = xt.reshape(n_btiles, Bt, T, I)
    xt = jnp.swapaxes(xt, 1, 2).reshape(n_btiles, T * Bt, I).astype(jnp.bfloat16)

    kernel = functools.partial(_lstm_kernel, chunk=chunk, batch_tile=Bt,
                               hidden_size=H, unroll=unroll)

    # Whole-array, single-buffered VMEM residency for the constant weights/biases.
    weight_spec = pl.BlockSpec(memory_space=pltpu.MemorySpace.VMEM)

    out = pl.pallas_call(
        kernel,
        out_shape=jax.ShapeDtypeStruct((n_btiles, Bt, O), jnp.float32),
        grid_spec=pltpu.PrefetchScalarGridSpec(
            num_scalar_prefetch=0,
            grid=(n_btiles, n_chunks),
            in_specs=[
                pl.BlockSpec((1, chunk * Bt, I), lambda b, t: (b, t, 0)),  # x chunk
                weight_spec,   # w_ih_t  (I, 4H)  bf16  (g cols pre-scaled x2)
                weight_spec,   # w_hh_t  (H, 4H)  bf16  (g cols pre-scaled x2)
                weight_spec,   # b       (1, 4H)  f32   (b_ih + b_hh, g band x2)
                weight_spec,   # w_lin_t (H, O)   f32
                weight_spec,   # b_lin   (1, O)   f32
            ],
            out_specs=pl.BlockSpec((1, Bt, O), lambda b, t: (b, 0, 0)),
            scratch_shapes=[
                pltpu.VMEM((chunk * Bt, 4 * H), jnp.float32),  # hoisted x projection
                pltpu.VMEM((Bt, H), jnp.float32),              # h
                pltpu.VMEM((Bt, H), jnp.float32),              # c
            ],
        ),
        compiler_params=pltpu.CompilerParams(
            # time is a true recurrence -> "arbitrary"; batch tiles are independent.
            dimension_semantics=("parallel", "arbitrary"),
            vmem_limit_bytes=max(32 << 20, min(vmem_budget, 96 << 20)),
        ),
    )(xt, packed["w_ih_t"], packed["w_hh_t"], packed["b"],
      packed["w_lin_t"], packed["b_lin"])

    return out.reshape(n_btiles * Bt, O)[:B]


def init_params(key, input_size, hidden_size, output_size):
    """Deterministic init mimicking PyTorch's uniform(-1/sqrt(H), 1/sqrt(H)), torch layout."""
    k = 1.0 / math.sqrt(hidden_size)
    ks = jax.random.split(key, 6)
    u = lambda kk, shape: jax.random.uniform(kk, shape, jnp.float32, -k, k)
    return {
        "w_ih": u(ks[0], (4 * hidden_size, input_size)),    # (4H, I)
        "w_hh": u(ks[1], (4 * hidden_size, hidden_size)),   # (4H, H)
        "b_ih": u(ks[2], (4 * hidden_size,)),
        "b_hh": u(ks[3], (4 * hidden_size,)),
        "w_lin": u(ks[4], (output_size, hidden_size)),      # (O, H)
        "b_lin": u(ks[5], (output_size,)),
    }


def pack_params(raw):
    """Torch-layout params -> kernel layout.

    Gates stay packed contiguously on the lane axis in torch order (i|f|g|o) with NO
    per-gate padding.  The g-gate columns of W_ih / W_hh / bias are pre-scaled by 2 so
    the kernel can run a single sigmoid over the packed gate vector and recover
    tanh(x) = 2*sigmoid(2x) - 1 for the g band (power-of-2 scaling is exact in bf16).
    """
    H = raw["w_hh"].shape[1]
    gate_scale = jnp.concatenate(
        [jnp.ones((2 * H,)), jnp.full((H,), 2.0), jnp.ones((H,))]).astype(jnp.float32)
    w_ih_t = raw["w_ih"].T * gate_scale[None, :]                 # (I, 4H)
    w_hh_t = raw["w_hh"].T * gate_scale[None, :]                 # (H, 4H)
    b = ((raw["b_ih"] + raw["b_hh"]) * gate_scale)[None, :]      # (1, 4H)
    return {
        "w_ih_t": w_ih_t.astype(jnp.bfloat16),
        "w_hh_t": w_hh_t.astype(jnp.bfloat16),
        "b": b.astype(jnp.float32),
        "w_lin_t": raw["w_lin"].T.astype(jnp.float32),           # (H, O)
        "b_lin": raw["b_lin"][None, :].astype(jnp.float32),      # (1, O)
        "hidden_size": H,
    }


def reference_forward(x, raw, matmul_dtype=None):
    """Pure-JAX reference matching torch.nn.LSTM(batch_first=True) + Linear semantics.
    If matmul_dtype is set, matmul operands are cast (f32 accumulation) to mirror the
    kernel's bf16-MXU / f32-accumulate numerics."""
    B, T, I = x.shape
    H = raw["w_hh"].shape[1]
    w_ih_t, w_hh_t = raw["w_ih"].T, raw["w_hh"].T
    b = (raw["b_ih"] + raw["b_hh"])[None, :]
    w_lin_t, b_lin = raw["w_lin"].T, raw["b_lin"][None, :]

    def mm(a, w):
        if matmul_dtype is not None:
            a, w = a.astype(matmul_dtype), w.astype(matmul_dtype)
        return jnp.dot(a, w, preferred_element_type=jnp.float32)

    def step(carry, x_t):
        h, c = carry
        gates = mm(x_t, w_ih_t) + mm(h, w_hh_t) + b
        i_g = jax.nn.sigmoid(gates[:, 0 * H:1 * H])
        f_g = jax.nn.sigmoid(gates[:, 1 * H:2 * H])
        g_g = jnp.tanh(gates[:, 2 * H:3 * H])
        o_g = jax.nn.sigmoid(gates[:, 3 * H:4 * H])
        c_new = f_g * c + i_g * g_g
        h_new = o_g * jnp.tanh(c_new)
        return (h_new, c_new), None

    h0 = jnp.zeros((B, H), jnp.float32)
    c0 = jnp.zeros((B, H), jnp.float32)
    (h, _), _ = jax.lax.scan(step, (h0, c0), jnp.swapaxes(x, 0, 1))
    return jnp.dot(h, w_lin_t, preferred_element_type=jnp.float32) + b_lin


if __name__ == "__main__":
    # Shapes consistent with the module: batch=2, seq=8, input_size=4,
    # hidden_layer_size=32, output_size=1.
    B, T, I, H, O = 2, 8, 4, 32, 1

    key = jax.random.PRNGKey(0)
    k_x, k_p = jax.random.split(key)
    x = jax.random.normal(k_x, (B, T, I), jnp.float32)
    raw = init_params(k_p, I, H, O)
    packed = pack_params(raw)

    out = lstm_model_forward(x, packed)
    out = jax.block_until_ready(out)
    assert out.shape == (B, O)

    # Check vs. a reference that mirrors the kernel's bf16-matmul / f32-accumulate.
    ref_bf16 = reference_forward(x, raw, matmul_dtype=jnp.bfloat16)
    assert jnp.allclose(out, ref_bf16, atol=5e-3, rtol=5e-3), (out, ref_bf16)

    # Parity with full-f32 PyTorch semantics (within bf16 MXU tolerance).
    ref_f32 = reference_forward(x, raw)
    assert jnp.allclose(out, ref_f32, atol=5e-2, rtol=5e-2), (out, ref_f32)

    print("KERNEL_OK")
</pallas_src>

<mosaic_0001>
module attributes {stable_mosaic.version = 11 : i64} {
  func.func @_lstm_kernel(%arg0: i32, %arg1: i32, %arg2: memref<1x64x4xbf16, #tpu.memory_space<vmem>>, %arg3: memref<4x128xbf16, #tpu.memory_space<vmem>>, %arg4: memref<32x128xbf16, #tpu.memory_space<vmem>>, %arg5: memref<1x128xf32, #tpu.memory_space<vmem>>, %arg6: memref<32x1xf32, #tpu.memory_space<vmem>>, %arg7: memref<1x1xf32, #tpu.memory_space<vmem>>, %arg8: memref<1x8x1xf32, #tpu.memory_space<vmem>>, %arg9: memref<64x128xf32, #tpu.memory_space<vmem>>, %arg10: memref<8x32xf32, #tpu.memory_space<vmem>>, %arg11: memref<8x32xf32, #tpu.memory_space<vmem>>) attributes {dimension_semantics = [#tpu.dimension_semantics<parallel>, #tpu.dimension_semantics<arbitrary>], iteration_bounds = array<i64: 1, 1>, scalar_prefetch = 0 : i64, scratch_operands = 3 : i64, tpu.core_type = #tpu.core_type<tc>, window_params = [{transform_indices = @transform_0, window_bounds = array<i64: 1, 64, 4>}, {pipeline_mode = #tpu.pipeline_mode<synchronous>, transform_indices = @transform_1, window_bounds = array<i64: 4, 128>}, {pipeline_mode = #tpu.pipeline_mode<synchronous>, transform_indices = @transform_2, window_bounds = array<i64: 32, 128>}, {pipeline_mode = #tpu.pipeline_mode<synchronous>, transform_indices = @transform_3, window_bounds = array<i64: 1, 128>}, {pipeline_mode = #tpu.pipeline_mode<synchronous>, transform_indices = @transform_4, window_bounds = array<i64: 32, 1>}, {pipeline_mode = #tpu.pipeline_mode<synchronous>, transform_indices = @transform_5, window_bounds = array<i64: 1, 1>}, {transform_indices = @transform_6, window_bounds = array<i64: 1, 8, 1>}]} {
    %c0_i32 = arith.constant 0 : i32
    %0 = arith.cmpi eq, %arg1, %c0_i32 : i32
    %1 = arith.extui %0 : i1 to i32
    %c0_i32_0 = arith.constant 0 : i32
    %2 = arith.cmpi ne, %1, %c0_i32_0 : i32
    scf.if %2 {
      %cst_84 = arith.constant 0.000000e+00 : f32
      %226 = vector.broadcast %cst_84 : f32 to vector<8x32xf32>
      %c0_85 = arith.constant 0 : index
      %c0_86 = arith.constant 0 : index
      %227 = vector.load %arg10[%c0_85, %c0_86] : memref<8x32xf32, #tpu.memory_space<vmem>>, vector<8x32xf32>
      tpu.vector_store %arg10[%c0_85, %c0_86], %226 {strides = array<i32>} : memref<8x32xf32, #tpu.memory_space<vmem>>, vector<8x32xf32>,
      %cst_87 = arith.constant 0.000000e+00 : f32
      %228 = vector.broadcast %cst_87 : f32 to vector<8x32xf32>
      %c0_88 = arith.constant 0 : index
      %c0_89 = arith.constant 0 : index
      %229 = vector.load %arg11[%c0_88, %c0_89] : memref<8x32xf32, #tpu.memory_space<vmem>>, vector<8x32xf32>
      tpu.vector_store %arg11[%c0_88, %c0_89], %228 {strides = array<i32>} : memref<8x32xf32, #tpu.memory_space<vmem>>, vector<8x32xf32>,
    } else {
    }
    %c0 = arith.constant 0 : index
    %c0_1 = arith.constant 0 : index
    %c0_2 = arith.constant 0 : index
    %3 = vector.load %arg2[%c0, %c0_1, %c0_2] : memref<1x64x4xbf16, #tpu.memory_space<vmem>>, vector<1x64x4xbf16>
    %4 = vector.shape_cast %3 : vector<1x64x4xbf16> to vector<64x4xbf16>
    %c0_3 = arith.constant 0 : index
    %c0_4 = arith.constant 0 : index
    %5 = vector.load %arg3[%c0_3, %c0_4] : memref<4x128xbf16, #tpu.memory_space<vmem>>, vector<4x128xbf16>
    %cst = arith.constant dense<0.000000e+00> : vector<64x128xf32>
    %6 = tpu.matmul %4, %5, %cst {dimension_numbers = #tpu.dot_dimension_numbers<[1], [0], [0], [1], [0, 0, 1, 1], [], []>} : vector<64x4xbf16>, vector<4x128xbf16>, vector<64x128xf32> -> vector<64x128xf32>
    %c0_5 = arith.constant 0 : index
    %c0_6 = arith.constant 0 : index
    %7 = vector.load %arg5[%c0_5, %c0_6] : memref<1x128xf32, #tpu.memory_space<vmem>>, vector<1x128xf32>
    %8 = vector.broadcast %7 : vector<1x128xf32> to vector<64x128xf32>
    %9 = arith.addf %6, %8 : vector<64x128xf32>
    %c0_7 = arith.constant 0 : index
    %c0_8 = arith.constant 0 : index
    %10 = vector.load %arg9[%c0_7, %c0_8] : memref<64x128xf32, #tpu.memory_space<vmem>>, vector<64x128xf32>
    tpu.vector_store %arg9[%c0_7, %c0_8], %9 {strides = array<i32>} : memref<64x128xf32, #tpu.memory_space<vmem>>, vector<64x128xf32>,
    %c0_9 = arith.constant 0 : index
    %c0_10 = arith.constant 0 : index
    %11 = vector.load %arg10[%c0_9, %c0_10] : memref<8x32xf32, #tpu.memory_space<vmem>>, vector<8x32xf32>
    %c0_11 = arith.constant 0 : index
    %c0_12 = arith.constant 0 : index
    %12 = vector.load %arg11[%c0_11, %c0_12] : memref<8x32xf32, #tpu.memory_space<vmem>>, vector<8x32xf32>
    %c0_i32_13 = arith.constant 0 : i32
    %c8_i32 = arith.constant 8 : i32
    %13 = arith.muli %c0_i32_13, %c8_i32 : i32
    %14 = tpu.assume_multiple %13, 8 : i32
    %15 = arith.index_cast %14 : i32 to index
    %c0_14 = arith.constant 0 : index
    %16 = vector.load %arg9[%15, %c0_14] : memref<64x128xf32, #tpu.memory_space<vmem>>, vector<8x128xf32>
    %17 = arith.truncf %11 : vector<8x32xf32> to vector<8x32xbf16>
    %c0_15 = arith.constant 0 : index
    %c0_16 = arith.constant 0 : index
    %18 = vector.load %arg4[%c0_15, %c0_16] : memref<32x128xbf16, #tpu.memory_space<vmem>>, vector<32x128xbf16>
    %cst_17 = arith.constant dense<0.000000e+00> : vector<8x128xf32>
    %19 = tpu.matmul %17, %18, %cst_17 {dimension_numbers = #tpu.dot_dimension_numbers<[1], [0], [0], [1], [0, 0, 1, 1], [], []>} : vector<8x32xbf16>, vector<32x128xbf16>, vector<8x128xf32> -> vector<8x128xf32>
    %20 = arith.addf %16, %19 : vector<8x128xf32>
    %21 = arith.negf %20 : vector<8x128xf32>
    %22 = math.exp %21 : vector<8x128xf32>
    %cst_18 = arith.constant 1.000000e+00 : f32
    %23 = vector.broadcast %cst_18 : f32 to vector<8x128xf32>
    %24 = arith.addf %23, %22 : vector<8x128xf32>
    %25 = arith.divf %23, %24 : vector<8x128xf32>
    %26 = vector.extract_strided_slice %25 {offsets = [0, 0], sizes = [8, 32], strides = [1, 1]} : vector<8x128xf32> to vector<8x32xf32>
    %27 = vector.extract_strided_slice %25 {offsets = [0, 32], sizes = [8, 32], strides = [1, 1]} : vector<8x128xf32> to vector<8x32xf32>
    %28 = vector.extract_strided_slice %25 {offsets = [0, 64], sizes = [8, 32], strides = [1, 1]} : vector<8x128xf32> to vector<8x32xf32>
    %cst_19 = arith.constant 2.000000e+00 : f32
    %29 = vector.broadcast %cst_19 : f32 to vector<8x32xf32>
    %30 = arith.mulf %29, %28 : vector<8x32xf32>
    %cst_20 = arith.constant 1.000000e+00 : f32
    %31 = vector.broadcast %cst_20 : f32 to vector<8x32xf32>
    %32 = arith.subf %30, %31 : vector<8x32xf32>
    %33 = vector.extract_strided_slice %25 {offsets = [0, 96], sizes = [8, 32], strides = [1, 1]} : vector<8x128xf32> to vector<8x32xf32>
    %34 = arith.mulf %27, %12 : vector<8x32xf32>
    %35 = arith.mulf %26, %32 : vector<8x32xf32>
    %36 = arith.addf %34, %35 : vector<8x32xf32>
    %37 = math.tanh %36 : vector<8x32xf32>
    %38 = arith.mulf %33, %37 : vector<8x32xf32>
    %c1_i32 = arith.constant 1 : i32
    %c8_i32_21 = arith.constant 8 : i32
    %39 = arith.muli %c1_i32, %c8_i32_21 : i32
    %40 = tpu.assume_multiple %39, 8 : i32
    %41 = arith.index_cast %40 : i32 to index
    %c0_22 = arith.constant 0 : index
    %42 = vector.load %arg9[%41, %c0_22] : memref<64x128xf32, #tpu.memory_space<vmem>>, vector<8x128xf32>
    %43 = arith.truncf %38 : vector<8x32xf32> to vector<8x32xbf16>
    %c0_23 = arith.constant 0 : index
    %c0_24 = arith.constant 0 : index
    %44 = vector.load %arg4[%c0_23, %c0_24] : memref<32x128xbf16, #tpu.memory_space<vmem>>, vector<32x128xbf16>
    %cst_25 = arith.constant dense<0.000000e+00> : vector<8x128xf32>
    %45 = tpu.matmul %43, %44, %cst_25 {dimension_numbers = #tpu.dot_dimension_numbers<[1], [0], [0], [1], [0, 0, 1, 1], [], []>} : vector<8x32xbf16>, vector<32x128xbf16>, vector<8x128xf32> -> vector<8x128xf32>
    %46 = arith.addf %42, %45 : vector<8x128xf32>
    %47 = arith.negf %46 : vector<8x128xf32>
    %48 = math.exp %47 : vector<8x128xf32>
    %cst_26 = arith.constant 1.000000e+00 : f32
    %49 = vector.broadcast %cst_26 : f32 to vector<8x128xf32>
    %50 = arith.addf %49, %48 : vector<8x128xf32>
    %51 = arith.divf %49, %50 : vector<8x128xf32>
    %52 = vector.extract_strided_slice %51 {offsets = [0, 0], sizes = [8, 32], strides = [1, 1]} : vector<8x128xf32> to vector<8x32xf32>
    %53 = vector.extract_strided_slice %51 {offsets = [0, 32], sizes = [8, 32], strides = [1, 1]} : vector<8x128xf32> to vector<8x32xf32>
    %54 = vector.extract_strided_slice %51 {offsets = [0, 64], sizes = [8, 32], strides = [1, 1]} : vector<8x128xf32> to vector<8x32xf32>
    %cst_27 = arith.constant 2.000000e+00 : f32
    %55 = vector.broadcast %cst_27 : f32 to vector<8x32xf32>
    %56 = arith.mulf %55, %54 : vector<8x32xf32>
    %cst_28 = arith.constant 1.000000e+00 : f32
    %57 = vector.broadcast %cst_28 : f32 to vector<8x32xf32>
    %58 = arith.subf %56, %57 : vector<8x32xf32>
    %59 = vector.extract_strided_slice %51 {offsets = [0, 96], sizes = [8, 32], strides = [1, 1]} : vector<8x128xf32> to vector<8x32xf32>
    %60 = arith.mulf %53, %36 : vector<8x32xf32>
    %61 = arith.mulf %52, %58 : vector<8x32xf32>
    %62 = arith.addf %60, %61 : vector<8x32xf32>
    %63 = math.tanh %62 : vector<8x32xf32>
    %64 = arith.mulf %59, %63 : vector<8x32xf32>
    %c2_i32 = arith.constant 2 : i32
    %c8_i32_29 = arith.constant 8 : i32
    %65 = arith.muli %c2_i32, %c8_i32_29 : i32
    %66 = tpu.assume_multiple %65, 8 : i32
    %67 = arith.index_cast %66 : i32 to index
    %c0_30 = arith.constant 0 : index
    %68 = vector.load %arg9[%67, %c0_30] : memref<64x128xf32, #tpu.memory_space<vmem>>, vector<8x128xf32>
    %69 = arith.truncf %64 : vector<8x32xf32> to vector<8x32xbf16>
    %c0_31 = arith.constant 0 : index
    %c0_32 = arith.constant 0 : index
    %70 = vector.load %arg4[%c0_31, %c0_32] : memref<32x128xbf16, #tpu.memory_space<vmem>>, vector<32x128xbf16>
    %cst_33 = arith.constant dense<0.000000e+00> : vector<8x128xf32>
    %71 = tpu.matmul %69, %70, %cst_33 {dimension_numbers = #tpu.dot_dimension_numbers<[1], [0], [0], [1], [0, 0, 1, 1], [], []>} : vector<8x32xbf16>, vector<32x128xbf16>, vector<8x128xf32> -> vector<8x128xf32>
    %72 = arith.addf %68, %71 : vector<8x128xf32>
    %73 = arith.negf %72 : vector<8x128xf32>
    %74 = math.exp %73 : vector<8x128xf32>
    %cst_34 = arith.constant 1.000000e+00 : f32
    %75 = vector.broadcast %cst_34 : f32 to vector<8x128xf32>
    %76 = arith.addf %75, %74 : vector<8x128xf32>
    %77 = arith.divf %75, %76 : vector<8x128xf32>
    %78 = vector.extract_strided_slice %77 {offsets = [0, 0], sizes = [8, 32], strides = [1, 1]} : vector<8x128xf32> to vector<8x32xf32>
    %79 = vector.extract_strided_slice %77 {offsets = [0, 32], sizes = [8, 32], strides = [1, 1]} : vector<8x128xf32> to vector<8x32xf32>
    %80 = vector.extract_strided_slice %77 {offsets = [0, 64], sizes = [8, 32], strides = [1, 1]} : vector<8x128xf32> to vector<8x32xf32>
    %cst_35 = arith.constant 2.000000e+00 : f32
    %81 = vector.broadcast %cst_35 : f32 to vector<8x32xf32>
    %82 = arith.mulf %81, %80 : vector<8x32xf32>
    %cst_36 = arith.constant 1.000000e+00 : f32
    %83 = vector.broadcast %cst_36 : f32 to vector<8x32xf32>
    %84 = arith.subf %82, %83 : vector<8x32xf32>
    %85 = vector.extract_strided_slice %77 {offsets = [0, 96], sizes = [8, 32], strides = [1, 1]} : vector<8x128xf32> to vector<8x32xf32>
    %86 = arith.mulf %79, %62 : vector<8x32xf32>
    %87 = arith.mulf %78, %84 : vector<8x32xf32>
    %88 = arith.addf %86, %87 : vector<8x32xf32>
    %89 = math.tanh %88 : vector<8x32xf32>
    %90 = arith.mulf %85, %89 : vector<8x32xf32>
    %c3_i32 = arith.constant 3 : i32
    %c8_i32_37 = arith.constant 8 : i32
    %91 = arith.muli %c3_i32, %c8_i32_37 : i32
    %92 = tpu.assume_multiple %91, 8 : i32
    %93 = arith.index_cast %92 : i32 to index
    %c0_38 = arith.constant 0 : index
    %94 = vector.load %arg9[%93, %c0_38] : memref<64x128xf32, #tpu.memory_space<vmem>>, vector<8x128xf32>
    %95 = arith.truncf %90 : vector<8x32xf32> to vector<8x32xbf16>
    %c0_39 = arith.constant 0 : index
    %c0_40 = arith.constant 0 : index
    %96 = vector.load %arg4[%c0_39, %c0_40] : memref<32x128xbf16, #tpu.memory_space<vmem>>, vector<32x128xbf16>
    %cst_41 = arith.constant dense<0.000000e+00> : vector<8x128xf32>
    %97 = tpu.matmul %95, %96, %cst_41 {dimension_numbers = #tpu.dot_dimension_numbers<[1], [0], [0], [1], [0, 0, 1, 1], [], []>} : vector<8x32xbf16>, vector<32x128xbf16>, vector<8x128xf32> -> vector<8x128xf32>
    %98 = arith.addf %94, %97 : vector<8x128xf32>
    %99 = arith.negf %98 : vector<8x128xf32>
    %100 = math.exp %99 : vector<8x128xf32>
    %cst_42 = arith.constant 1.000000e+00 : f32
    %101 = vector.broadcast %cst_42 : f32 to vector<8x128xf32>
    %102 = arith.addf %101, %100 : vector<8x128xf32>
    %103 = arith.divf %101, %102 : vector<8x128xf32>
    %104 = vector.extract_strided_slice %103 {offsets = [0, 0], sizes = [8, 32], strides = [1, 1]} : vector<8x128xf32> to vector<8x32xf32>
    %105 = vector.extract_strided_slice %103 {offsets = [0, 32], sizes = [8, 32], strides = [1, 1]} : vector<8x128xf32> to vector<8x32xf32>
    %106 = vector.extract_strided_slice %103 {offsets = [0, 64], sizes = [8, 32], strides = [1, 1]} : vector<8x128xf32> to vector<8x32xf32>
    %cst_43 = arith.constant 2.000000e+00 : f32
    %107 = vector.broadcast %cst_43 : f32 to vector<8x32xf32>
    %108 = arith.mulf %107, %106 : vector<8x32xf32>
    %cst_44 = arith.constant 1.000000e+00 : f32
    %109 = vector.broadcast %cst_44 : f32 to vector<8x32xf32>
    %110 = arith.subf %108, %109 : vector<8x32xf32>
    %111 = vector.extract_strided_slice %103 {offsets = [0, 96], sizes = [8, 32], strides = [1, 1]} : vector<8x128xf32> to vector<8x32xf32>
    %112 = arith.mulf %105, %88 : vector<8x32xf32>
    %113 = arith.mulf %104, %110 : vector<8x32xf32>
    %114 = arith.addf %112, %113 : vector<8x32xf32>
    %115 = math.tanh %114 : vector<8x32xf32>
    %116 = arith.mulf %111, %115 : vector<8x32xf32>
    %c4_i32 = arith.constant 4 : i32
    %c8_i32_45 = arith.constant 8 : i32
    %117 = arith.muli %c4_i32, %c8_i32_45 : i32
    %118 = tpu.assume_multiple %117, 8 : i32
    %119 = arith.index_cast %118 : i32 to index
    %c0_46 = arith.constant 0 : index
    %120 = vector.load %arg9[%119, %c0_46] : memref<64x128xf32, #tpu.memory_space<vmem>>, vector<8x128xf32>
    %121 = arith.truncf %116 : vector<8x32xf32> to vector<8x32xbf16>
    %c0_47 = arith.constant 0 : index
    %c0_48 = arith.constant 0 : index
    %122 = vector.load %arg4[%c0_47, %c0_48] : memref<32x128xbf16, #tpu.memory_space<vmem>>, vector<32x128xbf16>
    %cst_49 = arith.constant dense<0.000000e+00> : vector<8x128xf32>
    %123 = tpu.matmul %121, %122, %cst_49 {dimension_numbers = #tpu.dot_dimension_numbers<[1], [0], [0], [1], [0, 0, 1, 1], [], []>} : vector<8x32xbf16>, vector<32x128xbf16>, vector<8x128xf32> -> vector<8x128xf32>
    %124 = arith.addf %120, %123 : vector<8x128xf32>
    %125 = arith.negf %124 : vector<8x128xf32>
    %126 = math.exp %125 : vector<8x128xf32>
    %cst_50 = arith.constant 1.000000e+00 : f32
    %127 = vector.broadcast %cst_50 : f32 to vector<8x128xf32>
    %128 = arith.addf %127, %126 : vector<8x128xf32>
    %129 = arith.divf %127, %128 : vector<8x128xf32>
    %130 = vector.extract_strided_slice %129 {offsets = [0, 0], sizes = [8, 32], strides = [1, 1]} : vector<8x128xf32> to vector<8x32xf32>
    %131 = vector.extract_strided_slice %129 {offsets = [0, 32], sizes = [8, 32], strides = [1, 1]} : vector<8x128xf32> to vector<8x32xf32>
    %132 = vector.extract_strided_slice %129 {offsets = [0, 64], sizes = [8, 32], strides = [1, 1]} : vector<8x128xf32> to vector<8x32xf32>
    %cst_51 = arith.constant 2.000000e+00 : f32
    %133 = vector.broadcast %cst_51 : f32 to vector<8x32xf32>
    %134 = arith.mulf %133, %132 : vector<8x32xf32>
    %cst_52 = arith.constant 1.000000e+00 : f32
    %135 = vector.broadcast %cst_52 : f32 to vector<8x32xf32>
    %136 = arith.subf %134, %135 : vector<8x32xf32>
    %137 = vector.extract_strided_slice %129 {offsets = [0, 96], sizes = [8, 32], strides = [1, 1]} : vector<8x128xf32> to vector<8x32xf32>
    %138 = arith.mulf %131, %114 : vector<8x32xf32>
    %139 = arith.mulf %130, %136 : vector<8x32xf32>
    %140 = arith.addf %138, %139 : vector<8x32xf32>
    %141 = math.tanh %140 : vector<8x32xf32>
    %142 = arith.mulf %137, %141 : vector<8x32xf32>
    %c5_i32 = arith.constant 5 : i32
    %c8_i32_53 = arith.constant 8 : i32
    %143 = arith.muli %c5_i32, %c8_i32_53 : i32
    %144 = tpu.assume_multiple %143, 8 : i32
    %145 = arith.index_cast %144 : i32 to index
    %c0_54 = arith.constant 0 : index
    %146 = vector.load %arg9[%145, %c0_54] : memref<64x128xf32, #tpu.memory_space<vmem>>, vector<8x128xf32>
    %147 = arith.truncf %142 : vector<8x32xf32> to vector<8x32xbf16>
    %c0_55 = arith.constant 0 : index
    %c0_56 = arith.constant 0 : index
    %148 = vector.load %arg4[%c0_55, %c0_56] : memref<32x128xbf16, #tpu.memory_space<vmem>>, vector<32x128xbf16>
    %cst_57 = arith.constant dense<0.000000e+00> : vector<8x128xf32>
    %149 = tpu.matmul %147, %148, %cst_57 {dimension_numbers = #tpu.dot_dimension_numbers<[1], [0], [0], [1], [0, 0, 1, 1], [], []>} : vector<8x32xbf16>, vector<32x128xbf16>, vector<8x128xf32> -> vector<8x128xf32>
    %150 = arith.addf %146, %149 : vector<8x128xf32>
    %151 = arith.negf %150 : vector<8x128xf32>
    %152 = math.exp %151 : vector<8x128xf32>
    %cst_58 = arith.constant 1.000000e+00 : f32
    %153 = vector.broadcast %cst_58 : f32 to vector<8x128xf32>
    %154 = arith.addf %153, %152 : vector<8x128xf32>
    %155 = arith.divf %153, %154 : vector<8x128xf32>
    %156 = vector.extract_strided_slice %155 {offsets = [0, 0], sizes = [8, 32], strides = [1, 1]} : vector<8x128xf32> to vector<8x32xf32>
    %157 = vector.extract_strided_slice %155 {offsets = [0, 32], sizes = [8, 32], strides = [1, 1]} : vector<8x128xf32> to vector<8x32xf32>
    %158 = vector.extract_strided_slice %155 {offsets = [0, 64], sizes = [8, 32], strides = [1, 1]} : vector<8x128xf32> to vector<8x32xf32>
    %cst_59 = arith.constant 2.000000e+00 : f32
    %159 = vector.broadcast %cst_59 : f32 to vector<8x32xf32>
    %160 = arith.mulf %159, %158 : vector<8x32xf32>
    %cst_60 = arith.constant 1.000000e+00 : f32
    %161 = vector.broadcast %cst_60 : f32 to vector<8x32xf32>
    %162 = arith.subf %160, %161 : vector<8x32xf32>
    %163 = vector.extract_strided_slice %155 {offsets = [0, 96], sizes = [8, 32], strides = [1, 1]} : vector<8x128xf32> to vector<8x32xf32>
    %164 = arith.mulf %157, %140 : vector<8x32xf32>
    %165 = arith.mulf %156, %162 : vector<8x32xf32>
    %166 = arith.addf %164, %165 : vector<8x32xf32>
    %167 = math.tanh %166 : vector<8x32xf32>
    %168 = arith.mulf %163, %167 : vector<8x32xf32>
    %c6_i32 = arith.constant 6 : i32
    %c8_i32_61 = arith.constant 8 : i32
    %169 = arith.muli %c6_i32, %c8_i32_61 : i32
    %170 = tpu.assume_multiple %169, 8 : i32
    %171 = arith.index_cast %170 : i32 to index
    %c0_62 = arith.constant 0 : index
    %172 = vector.load %arg9[%171, %c0_62] : memref<64x128xf32, #tpu.memory_space<vmem>>, vector<8x128xf32>
    %173 = arith.truncf %168 : vector<8x32xf32> to vector<8x32xbf16>
    %c0_63 = arith.constant 0 : index
    %c0_64 = arith.constant 0 : index
    %174 = vector.load %arg4[%c0_63, %c0_64] : memref<32x128xbf16, #tpu.memory_space<vmem>>, vector<32x128xbf16>
    %cst_65 = arith.constant dense<0.000000e+00> : vector<8x128xf32>
    %175 = tpu.matmul %173, %174, %cst_65 {dimension_numbers = #tpu.dot_dimension_numbers<[1], [0], [0], [1], [0, 0, 1, 1], [], []>} : vector<8x32xbf16>, vector<32x128xbf16>, vector<8x128xf32> -> vector<8x128xf32>
    %176 = arith.addf %172, %175 : vector<8x128xf32>
    %177 = arith.negf %176 : vector<8x128xf32>
    %178 = math.exp %177 : vector<8x128xf32>
    %cst_66 = arith.constant 1.000000e+00 : f32
    %179 = vector.broadcast %cst_66 : f32 to vector<8x128xf32>
    %180 = arith.addf %179, %178 : vector<8x128xf32>
    %181 = arith.divf %179, %180 : vector<8x128xf32>
    %182 = vector.extract_strided_slice %181 {offsets = [0, 0], sizes = [8, 32], strides = [1, 1]} : vector<8x128xf32> to vector<8x32xf32>
    %183 = vector.extract_strided_slice %181 {offsets = [0, 32], sizes = [8, 32], strides = [1, 1]} : vector<8x128xf32> to vector<8x32xf32>
    %184 = vector.extract_strided_slice %181 {offsets = [0, 64], sizes = [8, 32], strides = [1, 1]} : vector<8x128xf32> to vector<8x32xf32>
    %cst_67 = arith.constant 2.000000e+00 : f32
    %185 = vector.broadcast %cst_67 : f32 to vector<8x32xf32>
    %186 = arith.mulf %185, %184 : vector<8x32xf32>
    %cst_68 = arith.constant 1.000000e+00 : f32
    %187 = vector.broadcast %cst_68 : f32 to vector<8x32xf32>
    %188 = arith.subf %186, %187 : vector<8x32xf32>
    %189 = vector.extract_strided_slice %181 {offsets = [0, 96], sizes = [8, 32], strides = [1, 1]} : vector<8x128xf32> to vector<8x32xf32>
    %190 = arith.mulf %183, %166 : vector<8x32xf32>
    %191 = arith.mulf %182, %188 : vector<8x32xf32>
    %192 = arith.addf %190, %191 : vector<8x32xf32>
    %193 = math.tanh %192 : vector<8x32xf32>
    %194 = arith.mulf %189, %193 : vector<8x32xf32>
    %c7_i32 = arith.constant 7 : i32
    %c8_i32_69 = arith.constant 8 : i32
    %195 = arith.muli %c7_i32, %c8_i32_69 : i32
    %196 = tpu.assume_multiple %195, 8 : i32
    %197 = arith.index_cast %196 : i32 to index
    %c0_70 = arith.constant 0 : index
    %198 = vector.load %arg9[%197, %c0_70] : memref<64x128xf32, #tpu.memory_space<vmem>>, vector<8x128xf32>
    %199 = arith.truncf %194 : vector<8x32xf32> to vector<8x32xbf16>
    %c0_71 = arith.constant 0 : index
    %c0_72 = arith.constant 0 : index
    %200 = vector.load %arg4[%c0_71, %c0_72] : memref<32x128xbf16, #tpu.memory_space<vmem>>, vector<32x128xbf16>
    %cst_73 = arith.constant dense<0.000000e+00> : vector<8x128xf32>
    %201 = tpu.matmul %199, %200, %cst_73 {dimension_numbers = #tpu.dot_dimension_numbers<[1], [0], [0], [1], [0, 0, 1, 1], [], []>} : vector<8x32xbf16>, vector<32x128xbf16>, vector<8x128xf32> -> vector<8x128xf32>
    %202 = arith.addf %198, %201 : vector<8x128xf32>
    %203 = arith.negf %202 : vector<8x128xf32>
    %204 = math.exp %203 : vector<8x128xf32>
    %cst_74 = arith.constant 1.000000e+00 : f32
    %205 = vector.broadcast %cst_74 : f32 to vector<8x128xf32>
    %206 = arith.addf %205, %204 : vector<8x128xf32>
    %207 = arith.divf %205, %206 : vector<8x128xf32>
    %208 = vector.extract_strided_slice %207 {offsets = [0, 0], sizes = [8, 32], strides = [1, 1]} : vector<8x128xf32> to vector<8x32xf32>
    %209 = vector.extract_strided_slice %207 {offsets = [0, 32], sizes = [8, 32], strides = [1, 1]} : vector<8x128xf32> to vector<8x32xf32>
    %210 = vector.extract_strided_slice %207 {offsets = [0, 64], sizes = [8, 32], strides = [1, 1]} : vector<8x128xf32> to vector<8x32xf32>
    %cst_75 = arith.constant 2.000000e+00 : f32
    %211 = vector.broadcast %cst_75 : f32 to vector<8x32xf32>
    %212 = arith.mulf %211, %210 : vector<8x32xf32>
    %cst_76 = arith.constant 1.000000e+00 : f32
    %213 = vector.broadcast %cst_76 : f32 to vector<8x32xf32>
    %214 = arith.subf %212, %213 : vector<8x32xf32>
    %215 = vector.extract_strided_slice %207 {offsets = [0, 96], sizes = [8, 32], strides = [1, 1]} : vector<8x128xf32> to vector<8x32xf32>
    %216 = arith.mulf %209, %192 : vector<8x32xf32>
    %217 = arith.mulf %208, %214 : vector<8x32xf32>
    %218 = arith.addf %216, %217 : vector<8x32xf32>
    %219 = math.tanh %218 : vector<8x32xf32>
    %220 = arith.mulf %215, %219 : vector<8x32xf32>
    %c8_i32_77 = arith.constant 8 : i32
    %c0_78 = arith.constant 0 : index
    %c0_79 = arith.constant 0 : index
    %221 = vector.load %arg10[%c0_78, %c0_79] : memref<8x32xf32, #tpu.memory_space<vmem>>, vector<8x32xf32>
    tpu.vector_store %arg10[%c0_78, %c0_79], %220 {strides = array<i32>} : memref<8x32xf32, #tpu.memory_space<vmem>>, vector<8x32xf32>,
    %c0_80 = arith.constant 0 : index
    %c0_81 = arith.constant 0 : index
    %222 = vector.load %arg11[%c0_80, %c0_81] : memref<8x32xf32, #tpu.memory_space<vmem>>, vector<8x32xf32>
    tpu.vector_store %arg11[%c0_80, %c0_81], %218 {strides = array<i32>} : memref<8x32xf32, #tpu.memory_space<vmem>>, vector<8x32xf32>,
    %c0_i32_82 = arith.constant 0 : i32
    %223 = arith.cmpi eq, %arg1, %c0_i32_82 : i32
    %224 = arith.extui %223 : i1 to i32
    %c0_i32_83 = arith.constant 0 : i32
    %225 = arith.cmpi ne, %224, %c0_i32_83 : i32
    scf.if %225 {
      %c0_84 = arith.constant 0 : index
      %c0_85 = arith.constant 0 : index
      %226 = vector.load %arg6[%c0_84, %c0_85] : memref<32x1xf32, #tpu.memory_space<vmem>>, vector<32x1xf32>
      %cst_86 = arith.constant dense<0.000000e+00> : vector<8x1xf32>
      %227 = tpu.matmul %220, %226, %cst_86 {dimension_numbers = #tpu.dot_dimension_numbers<[1], [0], [0], [1], [0, 0, 1, 1], [], []>} : vector<8x32xf32>, vector<32x1xf32>, vector<8x1xf32> -> vector<8x1xf32>
      %c0_87 = arith.constant 0 : index
      %c0_88 = arith.constant 0 : index
      %228 = vector.load %arg7[%c0_87, %c0_88] : memref<1x1xf32, #tpu.memory_space<vmem>>, vector<1x1xf32>
      %229 = vector.broadcast %228 : vector<1x1xf32> to vector<8x1xf32>
      %230 = arith.addf %227, %229 : vector<8x1xf32>
      %c0_89 = arith.constant 0 : index
      %c0_90 = arith.constant 0 : index
      %c0_91 = arith.constant 0 : index
      %231 = vector.load %arg8[%c0_89, %c0_90, %c0_91] : memref<1x8x1xf32, #tpu.memory_space<vmem>>, vector<1x8x1xf32>
      %232 = vector.shape_cast %231 : vector<1x8x1xf32> to vector<8x1xf32>
      %233 = vector.shape_cast %230 : vector<8x1xf32> to vector<1x8x1xf32>
      tpu.vector_store %arg8[%c0_89, %c0_90, %c0_91], %233 {strides = array<i32>} : memref<1x8x1xf32, #tpu.memory_space<vmem>>, vector<1x8x1xf32>,
    } else {
    }
    return
  }
  func.func @transform_0(%arg0: i32, %arg1: i32) -> (i32, i32, i32) {
    %c0_i32 = arith.constant 0 : i32
    %c0_i32_0 = arith.constant 0 : i32
    return %arg0, %arg1, %c0_i32 : i32, i32, i32
  }
  func.func @transform_1(%arg0: i32, %arg1: i32) -> (i32, i32) {
    %c0_i32 = arith.constant 0 : i32
    %c0_i32_0 = arith.constant 0 : i32
    %c0_i32_1 = arith.constant 0 : i32
    return %c0_i32, %c0_i32_0 : i32, i32
  }
  func.func @transform_2(%arg0: i32, %arg1: i32) -> (i32, i32) {
    %c0_i32 = arith.constant 0 : i32
    %c0_i32_0 = arith.constant 0 : i32
    %c0_i32_1 = arith.constant 0 : i32
    return %c0_i32, %c0_i32_0 : i32, i32
  }
  func.func @transform_3(%arg0: i32, %arg1: i32) -> (i32, i32) {
    %c0_i32 = arith.constant 0 : i32
    %c0_i32_0 = arith.constant 0 : i32
    %c0_i32_1 = arith.constant 0 : i32
    return %c0_i32, %c0_i32_0 : i32, i32
  }
  func.func @transform_4(%arg0: i32, %arg1: i32) -> (i32, i32) {
    %c0_i32 = arith.constant 0 : i32
    %c0_i32_0 = arith.constant 0 : i32
    %c0_i32_1 = arith.constant 0 : i32
    return %c0_i32, %c0_i32_0 : i32, i32
  }
  func.func @transform_5(%arg0: i32, %arg1: i32) -> (i32, i32) {
    %c0_i32 = arith.constant 0 : i32
    %c0_i32_0 = arith.constant 0 : i32
    %c0_i32_1 = arith.constant 0 : i32
    return %c0_i32, %c0_i32_0 : i32, i32
  }
  func.func @transform_6(%arg0: i32, %arg1: i32) -> (i32, i32, i32) {
    %c0_i32 = arith.constant 0 : i32
    %c0_i32_0 = arith.constant 0 : i32
    %c0_i32_1 = arith.constant 0 : i32
    return %arg0, %c0_i32, %c0_i32_0 : i32, i32, i32
  }
}

</mosaic_0001>

<llo_original>
// kernel: tpu_custom_call.1
$region0: #{tpu_custom_call.1}
  #allocation0 [shape = 'u32[]', space=smem, size = 0x4, offset = 0x4, fixed_abs, tag = 'smem constant byte address 0x4 - core index']
  #allocation1 [shape = 'u32[144,128]{1,0:T(1,128)}', space=vmem, size = 0x12000, scoped, tag = 'internal scratch']
  #allocation2 [shape = 'f32[64,128]{1,0:T(8,128)}', space=vmem, size = 0x8000, scoped, tag = 'scratch operand']
  #allocation3 [shape = 'f32[8,32]{1,0:T(8,128)}', space=vmem, size = 0x1000, scoped, tag = 'scratch operand']
  #allocation4 [shape = 'f32[8,32]{1,0:T(8,128)}', space=vmem, size = 0x1000, scoped, tag = 'scratch operand']
  #allocation5 [shape = 'f32[1,1]{1,0:T(1,128)S(1)}', space=vmem, size = 0x200, scoped, tag = 'scoped memory for tpu_custom_call.1']
  %s0 = inlined_call_operand.vmem [shape: bf16[1,64,4], index: 0, kind: input, shape index: {}]
  %s1 = inlined_call_operand.vmem [shape: bf16[4,128], index: 1, kind: input, shape index: {}]
  %s2 = inlined_call_operand.vmem [shape: bf16[32,128], index: 2, kind: input, shape index: {}]
  %s3 = inlined_call_operand.vmem [shape: f32[1,128], index: 3, kind: input, shape index: {}]
  %s4 = inlined_call_operand.vmem [shape: f32[32,1], index: 4, kind: input, shape index: {}]
  %s5 = inlined_call_operand.<no memory space> [shape: f32[1,1], index: 5, kind: input, shape index: {}]
  %s6 = inlined_call_operand.vmem [shape: f32[1,8,1], index: 6, kind: output, shape index: {}]
  %s7 = sld [smem:[#allocation0]]
  $region42: #{tpu_custom_call.1} parent=0
    _
  %s9 = ssub.s32 1, %s7
  %s10 = scalar_select 0, %s9, %s7
  %v11 = vstv %s5
  %12 = vst [vmem:[#allocation5] sm:$0x1] %v11
  // Predicated region
  $region2: #{tpu_custom_call.1} parent=0 // pred_check
    _
  $region3: #{tpu_custom_call.1} parent=0 // pred_check_branch
    %14 = sbr.rel (0) target = $region5
  $region4: #{tpu_custom_call.1} parent=0 // pred_region
    _
  $region5: #{tpu_custom_call.1} parent=0 // pred_fallthru
    _
  // Predicated region
  $region6: #{tpu_custom_call.1} parent=0 // pred_check
    _
  $region7: #{tpu_custom_call.1} parent=0 // pred_check_branch
    %16 = sbr.rel (0) target = $region9
  $region8: #{tpu_custom_call.1} parent=0 // pred_region
    _
  $region9: #{tpu_custom_call.1} parent=0 // pred_fallthru
    _
  // Predicated region
  $region10: #{tpu_custom_call.1} parent=0 // pred_check
    _
  $region11: #{tpu_custom_call.1} parent=0 // pred_check_branch
    %18 = sbr.rel (0) target = $region13
  $region12: #{tpu_custom_call.1} parent=0 // pred_region
    _
  $region13: #{tpu_custom_call.1} parent=0 // pred_fallthru
    _
  // Predicated region
  $region14: #{tpu_custom_call.1} parent=0 // pred_check
    _
  $region15: #{tpu_custom_call.1} parent=0 // pred_check_branch
    %20 = sbr.rel (0) target = $region17
  $region16: #{tpu_custom_call.1} parent=0 // pred_region
    _
  $region17: #{tpu_custom_call.1} parent=0 // pred_fallthru
    _
  // Predicated region
  $region18: #{tpu_custom_call.1} parent=0 // pred_check
    _
  $region19: #{tpu_custom_call.1} parent=0 // pred_check_branch
    %22 = sbr.rel (0) target = $region21
  $region20: #{tpu_custom_call.1} parent=0 // pred_region
    _
  $region21: #{tpu_custom_call.1} parent=0 // pred_fallthru
    _
  // Predicated region
  $region22: #{tpu_custom_call.1} parent=0 // pred_check
    _
  $region23: #{tpu_custom_call.1} parent=0 // pred_check_branch
    %24 = sbr.rel (0) target = $region25
  $region24: #{tpu_custom_call.1} parent=0 // pred_region
    _
  $region25: #{tpu_custom_call.1} parent=0 // pred_fallthru
    _
  %p26 = scmp.eq.s32.totalorder 0, 0
  // Predicated region
  $region26: #{tpu_custom_call.1} parent=0 // pred_check
    %p27 = pneg %p26
  $region27: #{tpu_custom_call.1} parent=0 // pred_check_branch
    %29 = sbr.rel (%p27) target = $region29
  $region28: #{tpu_custom_call.1} parent=0 // pred_region
    %vm30 = vcmask 261120
    %31 = vst.msk [vmem:[#allocation3] sm:$0xff] %vm30, 0.0
    %32 = vst.msk [vmem:[#allocation4] sm:$0xff] %vm30, 0.0
  $region29: #{tpu_custom_call.1} parent=0 // pred_fallthru
    _
  %v33 = vld [vmem:[%s0] sm:$0xf]
  %v34 = vld [vmem:[%s0 + $0x4] sm:$0xf]
  %v35 = vld [vmem:[%s0 + $0x8] sm:$0xf]
  %v36 = vld [vmem:[%s0 + $0xc] sm:$0xf]
  %v37 = vld [vmem:[%s0 + $0x10] sm:$0xf]
  %v38 = vld [vmem:[%s0 + $0x14] sm:$0xf]
  %v39 = vld [vmem:[%s0 + $0x18] sm:$0xf]
  %v40 = vld [vmem:[%s0 + $0x1c] sm:$0xf]
  %v41 = vld [vmem:[%s1] sm:$0x3]
  %v42 = vld [vmem:[%s3] sm:$0x1]
  %v44 = vlaneseq
  %v45 = vshrl.u32 %v44, 7
  %v46 = vsub.s32 0, %v45
  %v47 = vrot.slane %v42, %v46
  %v57 = vunpack.c.l.b16 %v33
  %v58 = vunpack.c.l.b16 %v34
  %v59 = vunpack.c.l.b16 %v35
  %v60 = vunpack.c.l.b16 %v36
  %v61 = vunpack.c.l.b16 %v37
  %v62 = vunpack.c.l.b16 %v38
  %v63 = vunpack.c.l.b16 %v39
  %v64 = vunpack.c.l.b16 %v40
  %v65 = vpack.c.b16 %v58, %v57
  %v66 = vpack.c.b16 %v60, %v59
  %v67 = vpack.c.b16 %v62, %v61
  %v68 = vpack.c.b16 %v64, %v63
  %vm69 = vcmask 31744
  %v71 = vsel %vm69, %v65, 0
  %v74 = vsel %vm69, %v66, 0
  %v77 = vsel %vm69, %v67, 0
  %v80 = vsel %vm69, %v68, 0
  %vm82 = vcmask 1041408
  %v84 = vsel %vm82, %v41, 0
  %86 = vmatprep.subr.bf16.mxu0 0
  %87 = vmatpush1.bf16.msra.mxu0 %v84
  %88 = vmatprep.subr.bf16.mxu0 0
  %89 = vmatpush1.bf16.msra.mxu0 0
  %90 = vmatprep.subr.bf16.mxu0 0
  %91 = vmatpush1.bf16.msra.mxu0 0
  %92 = vmatprep.subr.bf16.mxu0 0
  %93 = vmatpush1.bf16.msra.mxu0 0
  %94 = vmatprep.subr.bf16.mxu0 0
  %95 = vmatpush1.bf16.msra.mxu0 0
  %96 = vmatprep.subr.bf16.mxu0 0
  %97 = vmatpush1.bf16.msra.mxu0 0
  %98 = vmatprep.subr.bf16.mxu0 0
  %99 = vmatpush1.bf16.msra.mxu0 0
  %100 = vmatprep.subr.bf16.mxu0 0
  %101 = vmatpush1.bf16.msra.mxu0 0
  %102 = vmatprep.subr.bf16.mxu0 0
  %103 = vmatpush1.bf16.msra.mxu0 0
  %104 = vmatprep.subr.bf16.mxu0 0
  %105 = vmatpush1.bf16.msra.mxu0 0
  %106 = vmatprep.subr.bf16.mxu0 0
  %107 = vmatpush1.bf16.msra.mxu0 0
  %108 = vmatprep.subr.bf16.mxu0 0
  %109 = vmatpush1.bf16.msra.mxu0 0
  %110 = vmatprep.subr.bf16.mxu0 0
  %111 = vmatpush1.bf16.msra.mxu0 0
  %112 = vmatprep.subr.bf16.mxu0 0
  %113 = vmatpush1.bf16.msra.mxu0 0
  %114 = vmatprep.subr.bf16.mxu0 0
  %115 = vmatpush1.bf16.msra.mxu0 0
  %116 = vmatprep.subr.bf16.mxu0 0
  %117 = vmatpush1.bf16.msra.mxu0 0
  %118 = vmatprep.mubr.bf16.mxu0 0
  %119 = vmatmul.mubr.bf16.gmra.mrb[0].mxu0 %v71
  %v120 = vpop.f32.mrb[0].mxu0
  %v121 = vadd.f32 %v47, %v120
  %v122 = vpop.f32.mrb[0].mxu0
  %v123 = vpop.f32.mrb[0].mxu0
  %v124 = vadd.f32 %v47, %v123
  %v125 = vpop.f32.mrb[0].mxu0
  %126 = vmatprep.mubr.bf16.mxu0 0
  %127 = vmatmul.mubr.bf16.gmra.mrb[0].mxu0 %v74
  %v128 = vpop.f32.mrb[0].mxu0
  %v129 = vadd.f32 %v47, %v128
  %v130 = vpop.f32.mrb[0].mxu0
  %v131 = vpop.f32.mrb[0].mxu0
  %v132 = vadd.f32 %v47, %v131
  %v133 = vpop.f32.mrb[0].mxu0
  %134 = vmatprep.mubr.bf16.mxu0 0
  %135 = vmatmul.mubr.bf16.gmra.mrb[0].mxu0 %v77
  %v136 = vpop.f32.mrb[0].mxu0
  %v137 = vadd.f32 %v47, %v136
  %v138 = vpop.f32.mrb[0].mxu0
  %v139 = vpop.f32.mrb[0].mxu0
  %v140 = vadd.f32 %v47, %v139
  %v141 = vpop.f32.mrb[0].mxu0
  %142 = vmatprep.mubr.bf16.mxu0 0
  %143 = vmatmul.mubr.bf16.gmra.mrb[0].mxu0 %v80
  %v144 = vpop.f32.mrb[0].mxu0
  %v145 = vadd.f32 %v47, %v144
  %v146 = vpop.f32.mrb[0].mxu0
  %v147 = vpop.f32.mrb[0].mxu0
  %v148 = vadd.f32 %v47, %v147
  %v149 = vpop.f32.mrb[0].mxu0
  %150 = vdwg.mxu0
  %151 = vst [vmem:[#allocation2] sm:$0xff] %v121
  %152 = vst [vmem:[#allocation2 + $0x8] sm:$0xff] %v124
  %153 = vst [vmem:[#allocation2 + $0x10] sm:$0xff] %v129
  %154 = vst [vmem:[#allocation2 + $0x18] sm:$0xff] %v132
  %155 = vst [vmem:[#allocation2 + $0x20] sm:$0xff] %v137
  %156 = vst [vmem:[#allocation2 + $0x28] sm:$0xff] %v140
  %157 = vst [vmem:[#allocation2 + $0x30] sm:$0xff] %v145
  %158 = vst [vmem:[#allocation2 + $0x38] sm:$0xff] %v148
  %v159 = vld [vmem:[#allocation3] sm:$0xff]
  %v160 = vld [vmem:[#allocation4] sm:$0xff]
  %v161 = vld [vmem:[#allocation2] sm:$0xff]
  %v162 = vpack.c.bf16 %v159, %v159
  %v163 = vld [vmem:[%s2] sm:$0xf]
  %v164 = vld [vmem:[%s2 + $0x4] sm:$0xf]
  %v165 = vld [vmem:[%s2 + $0x8] sm:$0xf]
  %v166 = vld [vmem:[%s2 + $0xc] sm:$0xf]
  %v171 = vunpack.c.l.b16 %v163
  %v172 = vunpack.c.l.b16 %v164
  %v173 = vunpack.c.l.b16 %v165
  %v174 = vunpack.c.l.b16 %v166
  %v175 = vpack.c.b16 %v172, %v171
  %v176 = vpack.c.b16 %v174, %v173
  %vm179 = vcmask 261120
  %v181 = vsel %vm179, %v162, 0
  %183 = vmatprep.subr.bf16.mxu0 0
  %184 = vmatpush1.bf16.msra.mxu0 %v175
  %185 = vmatprep.subr.bf16.mxu0 0
  %186 = vmatpush1.bf16.msra.mxu0 %v176
  %187 = vmatprep.subr.bf16.mxu0 0
  %188 = vmatpush1.bf16.msra.mxu0 0
  %189 = vmatprep.subr.bf16.mxu0 0
  %190 = vmatpush1.bf16.msra.mxu0 0
  %191 = vmatprep.subr.bf16.mxu0 0
  %192 = vmatpush1.bf16.msra.mxu0 0
  %193 = vmatprep.subr.bf16.mxu0 0
  %194 = vmatpush1.bf16.msra.mxu0 0
  %195 = vmatprep.subr.bf16.mxu0 0
  %196 = vmatpush1.bf16.msra.mxu0 0
  %197 = vmatprep.subr.bf16.mxu0 0
  %198 = vmatpush1.bf16.msra.mxu0 0
  %199 = vmatprep.subr.bf16.mxu0 0
  %200 = vmatpush1.bf16.msra.mxu0 0
  %201 = vmatprep.subr.bf16.mxu0 0
  %202 = vmatpush1.bf16.msra.mxu0 0
  %203 = vmatprep.subr.bf16.mxu0 0
  %204 = vmatpush1.bf16.msra.mxu0 0
  %205 = vmatprep.subr.bf16.mxu0 0
  %206 = vmatpush1.bf16.msra.mxu0 0
  %207 = vmatprep.subr.bf16.mxu0 0
  %208 = vmatpush1.bf16.msra.mxu0 0
  %209 = vmatprep.subr.bf16.mxu0 0
  %210 = vmatpush1.bf16.msra.mxu0 0
  %211 = vmatprep.subr.bf16.mxu0 0
  %212 = vmatpush1.bf16.msra.mxu0 0
  %213 = vmatprep.subr.bf16.mxu0 0
  %214 = vmatpush1.bf16.msra.mxu0 0
  %215 = vmatprep.mubr.bf16.mxu0 0
  %216 = vmatmul.mubr.bf16.gmra.mrb[0].mxu0 %v181
  %v217 = vpop.f32.mrb[0].mxu0
  %v218 = vadd.f32 0.0, %v217
  %v219 = vpop.f32.mrb[0].mxu0
  %v220 = vpop.f32.mrb[0].mxu0
  %v221 = vpop.f32.mrb[0].mxu0
  %222 = vdwg.mxu0
  %v223 = vadd.f32 %v161, %v218
  %v224 = vxor.u32 %v223, 2147483648
  %v225 = vmul.f32 %v224, 1.442695
  %v226 = vpow.pop %v225
  %v227 = vadd.f32 %v226, 1.0
  %v228 = vrcp.pop %v227
  %v229 = vmul.f32 1.0, %v228
  %v230 = vmul.f32 %v229, 2.0
  %v231 = vsub.f32 %v230, 1.0
  %233 = vrot.lane.b32.xlu0 %v160, 32
  %v234 = vpop.permute.xlu0 %233
  %v236 = vmul.f32 %v229, %v234
  %238 = vrot.lane.b32.xlu0 %v231, 64
  %v239 = vpop.permute.xlu0 %238
  %v241 = vmul.f32 %v229, %v239
  %243 = vrot.lane.b32.xlu0 %v241, 32
  %v244 = vpop.permute.xlu0 %243
  %v246 = vadd.f32 %v236, %v244
  %v247 = vtanh.pop %v246
  %249 = vrot.lane.b32.xlu0 %v247, 64
  %v250 = vpop.permute.xlu0 %249
  %v252 = vmul.f32 %v229, %v250
  %s253 = scalar_lea.vmem [#allocation2], 8
  %v254 = vld [vmem:[%s253] sm:$0xff]
  %v255 = vpack.c.bf16 %v252, %v252
  %257 = vrot.lane.b32.xlu0 %v255, 32
  %v258 = vpop.permute.xlu0 %257
  %v260 = vsel %vm179, %v258, 0
  %262 = vmatprep.subr.bf16.mxu0 0
  %263 = vmatpush1.bf16.msra.mxu0 %v175
  %264 = vmatprep.subr.bf16.mxu0 0
  %265 = vmatpush1.bf16.msra.mxu0 %v176
  %266 = vmatprep.subr.bf16.mxu0 0
  %267 = vmatpush1.bf16.msra.mxu0 0
  %268 = vmatprep.subr.bf16.mxu0 0
  %269 = vmatpush1.bf16.msra.mxu0 0
  %270 = vmatprep.subr.bf16.mxu0 0
  %271 = vmatpush1.bf16.msra.mxu0 0
  %272 = vmatprep.subr.bf16.mxu0 0
  %273 = vmatpush1.bf16.msra.mxu0 0
  %274 = vmatprep.subr.bf16.mxu0 0
  %275 = vmatpush1.bf16.msra.mxu0 0
  %276 = vmatprep.subr.bf16.mxu0 0
  %277 = vmatpush1.bf16.msra.mxu0 0
  %278 = vmatprep.subr.bf16.mxu0 0
  %279 = vmatpush1.bf16.msra.mxu0 0
  %280 = vmatprep.subr.bf16.mxu0 0
  %281 = vmatpush1.bf16.msra.mxu0 0
  %282 = vmatprep.subr.bf16.mxu0 0
  %283 = vmatpush1.bf16.msra.mxu0 0
  %284 = vmatprep.subr.bf16.mxu0 0
  %285 = vmatpush1.bf16.msra.mxu0 0
  %286 = vmatprep.subr.bf16.mxu0 0
  %287 = vmatpush1.bf16.msra.mxu0 0
  %288 = vmatprep.subr.bf16.mxu0 0
  %289 = vmatpush1.bf16.msra.mxu0 0
  %290 = vmatprep.subr.bf16.mxu0 0
  %291 = vmatpush1.bf16.msra.mxu0 0
  %292 = vmatprep.subr.bf16.mxu0 0
  %293 = vmatpush1.bf16.msra.mxu0 0
  %294 = vmatprep.mubr.bf16.mxu0 0
  %295 = vmatmul.mubr.bf16.gmra.mrb[0].mxu0 %v260
  %v296 = vpop.f32.mrb[0].mxu0
  %v297 = vadd.f32 0.0, %v296
  %v298 = vpop.f32.mrb[0].mxu0
  %v299 = vpop.f32.mrb[0].mxu0
  %v300 = vpop.f32.mrb[0].mxu0
  %301 = vdwg.mxu0
  %v302 = vadd.f32 %v254, %v297
  %v303 = vxor.u32 %v302, 2147483648
  %v304 = vmul.f32 %v303, 1.442695
  %v305 = vpow.pop %v304
  %v306 = vadd.f32 %v305, 1.0
  %v307 = vrcp.pop %v306
  %v308 = vmul.f32 1.0, %v307
  %v309 = vmul.f32 %v308, 2.0
  %v310 = vsub.f32 %v309, 1.0
  %v311 = vmul.f32 %v308, %v246
  %313 = vrot.lane.b32.xlu0 %v310, 64
  %v314 = vpop.permute.xlu0 %313
  %v316 = vmul.f32 %v308, %v314
  %318 = vrot.lane.b32.xlu0 %v316, 32
  %v319 = vpop.permute.xlu0 %318
  %v321 = vadd.f32 %v311, %v319
  %v322 = vtanh.pop %v321
  %324 = vrot.lane.b32.xlu0 %v322, 64
  %v325 = vpop.permute.xlu0 %324
  %v327 = vmul.f32 %v308, %v325
  %s328 = scalar_lea.vmem [#allocation2], 16
  %v329 = vld [vmem:[%s328] sm:$0xff]
  %v330 = vpack.c.bf16 %v327, %v327
  %332 = vrot.lane.b32.xlu0 %v330, 32
  %v333 = vpop.permute.xlu0 %332
  %v335 = vsel %vm179, %v333, 0
  %337 = vmatprep.subr.bf16.mxu0 0
  %338 = vmatpush1.bf16.msra.mxu0 %v175
  %339 = vmatprep.subr.bf16.mxu0 0
  %340 = vmatpush1.bf16.msra.mxu0 %v176
  %341 = vmatprep.subr.bf16.mxu0 0
  %342 = vmatpush1.bf16.msra.mxu0 0
  %343 = vmatprep.subr.bf16.mxu0 0
  %344 = vmatpush1.bf16.msra.mxu0 0
  %345 = vmatprep.subr.bf16.mxu0 0
  %346 = vmatpush1.bf16.msra.mxu0 0
  %347 = vmatprep.subr.bf16.mxu0 0
  %348 = vmatpush1.bf16.msra.mxu0 0
  %349 = vmatprep.subr.bf16.mxu0 0
  %350 = vmatpush1.bf16.msra.mxu0 0
  %351 = vmatprep.subr.bf16.mxu0 0
  %352 = vmatpush1.bf16.msra.mxu0 0
  %353 = vmatprep.subr.bf16.mxu0 0
  %354 = vmatpush1.bf16.msra.mxu0 0
  %355 = vmatprep.subr.bf16.mxu0 0
  %356 = vmatpush1.bf16.msra.mxu0 0
  %357 = vmatprep.subr.bf16.mxu0 0
  %358 = vmatpush1.bf16.msra.mxu0 0
  %359 = vmatprep.subr.bf16.mxu0 0
  %360 = vmatpush1.bf16.msra.mxu0 0
  %361 = vmatprep.subr.bf16.mxu0 0
  %362 = vmatpush1.bf16.msra.mxu0 0
  %363 = vmatprep.subr.bf16.mxu0 0
  %364 = vmatpush1.bf16.msra.mxu0 0
  %365 = vmatprep.subr.bf16.mxu0 0
  %366 = vmatpush1.bf16.msra.mxu0 0
  %367 = vmatprep.subr.bf16.mxu0 0
  %368 = vmatpush1.bf16.msra.mxu0 0
  %369 = vmatprep.mubr.bf16.mxu0 0
  %370 = vmatmul.mubr.bf16.gmra.mrb[0].mxu0 %v335
  %v371 = vpop.f32.mrb[0].mxu0
  %v372 = vadd.f32 0.0, %v371
  %v373 = vpop.f32.mrb[0].mxu0
  %v374 = vpop.f32.mrb[0].mxu0
  %v375 = vpop.f32.mrb[0].mxu0
  %376 = vdwg.mxu0
  %v377 = vadd.f32 %v329, %v372
  %v378 = vxor.u32 %v377, 2147483648
  %v379 = vmul.f32 %v378, 1.442695
  %v380 = vpow.pop %v379
  %v381 = vadd.f32 %v380, 1.0
  %v382 = vrcp.pop %v381
  %v383 = vmul.f32 1.0, %v382
  %v384 = vmul.f32 %v383, 2.0
  %v385 = vsub.f32 %v384, 1.0
  %v386 = vmul.f32 %v383, %v321
  %388 = vrot.lane.b32.xlu0 %v385, 64
  %v389 = vpop.permute.xlu0 %388
  %v391 = vmul.f32 %v383, %v389
  %393 = vrot.lane.b32.xlu0 %v391, 32
  %v394 = vpop.permute.xlu0 %393
  %v396 = vadd.f32 %v386, %v394
  %v397 = vtanh.pop %v396
  %399 = vrot.lane.b32.xlu0 %v397, 64
  %v400 = vpop.permute.xlu0 %399
  %v402 = vmul.f32 %v383, %v400
  %s403 = scalar_lea.vmem [#allocation2], 24
  %v404 = vld [vmem:[%s403] sm:$0xff]
  %v405 = vpack.c.bf16 %v402, %v402
  %407 = vrot.lane.b32.xlu0 %v405, 32
  %v408 = vpop.permute.xlu0 %407
  %v410 = vsel %vm179, %v408, 0
  %412 = vmatprep.subr.bf16.mxu0 0
  %413 = vmatpush1.bf16.msra.mxu0 %v175
  %414 = vmatprep.subr.bf16.mxu0 0
  %415 = vmatpush1.bf16.msra.mxu0 %v176
  %416 = vmatprep.subr.bf16.mxu0 0
  %417 = vmatpush1.bf16.msra.mxu0 0
  %418 = vmatprep.subr.bf16.mxu0 0
  %419 = vmatpush1.bf16.msra.mxu0 0
  %420 = vmatprep.subr.bf16.mxu0 0
  %421 = vmatpush1.bf16.msra.mxu0 0
  %422 = vmatprep.subr.bf16.mxu0 0
  %423 = vmatpush1.bf16.msra.mxu0 0
  %424 = vmatprep.subr.bf16.mxu0 0
  %425 = vmatpush1.bf16.msra.mxu0 0
  %426 = vmatprep.subr.bf16.mxu0 0
  %427 = vmatpush1.bf16.msra.mxu0 0
  %428 = vmatprep.subr.bf16.mxu0 0
  %429 = vmatpush1.bf16.msra.mxu0 0
  %430 = vmatprep.subr.bf16.mxu0 0
  %431 = vmatpush1.bf16.msra.mxu0 0
  %432 = vmatprep.subr.bf16.mxu0 0
  %433 = vmatpush1.bf16.msra.mxu0 0
  %434 = vmatprep.subr.bf16.mxu0 0
  %435 = vmatpush1.bf16.msra.mxu0 0
  %436 = vmatprep.subr.bf16.mxu0 0
  %437 = vmatpush1.bf16.msra.mxu0 0
  %438 = vmatprep.subr.bf16.mxu0 0
  %439 = vmatpush1.bf16.msra.mxu0 0
  %440 = vmatprep.subr.bf16.mxu0 0
  %441 = vmatpush1.bf16.msra.mxu0 0
  %442 = vmatprep.subr.bf16.mxu0 0
  %443 = vmatpush1.bf16.msra.mxu0 0
  %444 = vmatprep.mubr.bf16.mxu0 0
  %445 = vmatmul.mubr.bf16.gmra.mrb[0].mxu0 %v410
  %v446 = vpop.f32.mrb[0].mxu0
  %v447 = vadd.f32 0.0, %v446
  %v448 = vpop.f32.mrb[0].mxu0
  %v449 = vpop.f32.mrb[0].mxu0
  %v450 = vpop.f32.mrb[0].mxu0
  %451 = vdwg.mxu0
  %v452 = vadd.f32 %v404, %v447
  %v453 = vxor.u32 %v452, 2147483648
  %v454 = vmul.f32 %v453, 1.442695
  %v455 = vpow.pop %v454
  %v456 = vadd.f32 %v455, 1.0
  %v457 = vrcp.pop %v456
  %v458 = vmul.f32 1.0, %v457
  %v459 = vmul.f32 %v458, 2.0
  %v460 = vsub.f32 %v459, 1.0
  %v461 = vmul.f32 %v458, %v396
  %463 = vrot.lane.b32.xlu0 %v460, 64
  %v464 = vpop.permute.xlu0 %463
  %v466 = vmul.f32 %v458, %v464
  %468 = vrot.lane.b32.xlu0 %v466, 32
  %v469 = vpop.permute.xlu0 %468
  %v471 = vadd.f32 %v461, %v469
  %v472 = vtanh.pop %v471
  %474 = vrot.lane.b32.xlu0 %v472, 64
  %v475 = vpop.permute.xlu0 %474
  %v477 = vmul.f32 %v458, %v475
  %s478 = scalar_lea.vmem [#allocation2], 32
  %v479 = vld [vmem:[%s478] sm:$0xff]
  %v480 = vpack.c.bf16 %v477, %v477
  %482 = vrot.lane.b32.xlu0 %v480, 32
  %v483 = vpop.permute.xlu0 %482
  %v485 = vsel %vm179, %v483, 0
  %487 = vmatprep.subr.bf16.mxu0 0
  %488 = vmatpush1.bf16.msra.mxu0 %v175
  %489 = vmatprep.subr.bf16.mxu0 0
  %490 = vmatpush1.bf16.msra.mxu0 %v176
  %491 = vmatprep.subr.bf16.mxu0 0
  %492 = vmatpush1.bf16.msra.mxu0 0
  %493 = vmatprep.subr.bf16.mxu0 0
  %494 = vmatpush1.bf16.msra.mxu0 0
  %495 = vmatprep.subr.bf16.mxu0 0
  %496 = vmatpush1.bf16.msra.mxu0 0
  %497 = vmatprep.subr.bf16.mxu0 0
  %498 = vmatpush1.bf16.msra.mxu0 0
  %499 = vmatprep.subr.bf16.mxu0 0
  %500 = vmatpush1.bf16.msra.mxu0 0
  %501 = vmatprep.subr.bf16.mxu0 0
  %502 = vmatpush1.bf16.msra.mxu0 0
  %503 = vmatprep.subr.bf16.mxu0 0
  %504 = vmatpush1.bf16.msra.mxu0 0
  %505 = vmatprep.subr.bf16.mxu0 0
  %506 = vmatpush1.bf16.msra.mxu0 0
  %507 = vmatprep.subr.bf16.mxu0 0
  %508 = vmatpush1.bf16.msra.mxu0 0
  %509 = vmatprep.subr.bf16.mxu0 0
  %510 = vmatpush1.bf16.msra.mxu0 0
  %511 = vmatprep.subr.bf16.mxu0 0
  %512 = vmatpush1.bf16.msra.mxu0 0
  %513 = vmatprep.subr.bf16.mxu0 0
  %514 = vmatpush1.bf16.msra.mxu0 0
  %515 = vmatprep.subr.bf16.mxu0 0
  %516 = vmatpush1.bf16.msra.mxu0 0
  %517 = vmatprep.subr.bf16.mxu0 0
  %518 = vmatpush1.bf16.msra.mxu0 0
  %519 = vmatprep.mubr.bf16.mxu0 0
  %520 = vmatmul.mubr.bf16.gmra.mrb[0].mxu0 %v485
  %v521 = vpop.f32.mrb[0].mxu0
  %v522 = vadd.f32 0.0, %v521
  %v523 = vpop.f32.mrb[0].mxu0
  %v524 = vpop.f32.mrb[0].mxu0
  %v525 = vpop.f32.mrb[0].mxu0
  %526 = vdwg.mxu0
  %v527 = vadd.f32 %v479, %v522
  %v528 = vxor.u32 %v527, 2147483648
  %v529 = vmul.f32 %v528, 1.442695
  %v530 = vpow.pop %v529
  %v531 = vadd.f32 %v530, 1.0
  %v532 = vrcp.pop %v531
  %v533 = vmul.f32 1.0, %v532
  %v534 = vmul.f32 %v533, 2.0
  %v535 = vsub.f32 %v534, 1.0
  %v536 = vmul.f32 %v533, %v471
  %538 = vrot.lane.b32.xlu0 %v535, 64
  %v539 = vpop.permute.xlu0 %538
  %v541 = vmul.f32 %v533, %v539
  %543 = vrot.lane.b32.xlu0 %v541, 32
  %v544 = vpop.permute.xlu0 %543
  %v546 = vadd.f32 %v536, %v544
  %v547 = vtanh.pop %v546
  %549 = vrot.lane.b32.xlu0 %v547, 64
  %v550 = vpop.permute.xlu0 %549
  %v552 = vmul.f32 %v533, %v550
  %s553 = scalar_lea.vmem [#allocation2], 40
  %v554 = vld [vmem:[%s553] sm:$0xff]
  %v555 = vpack.c.bf16 %v552, %v552
  %557 = vrot.lane.b32.xlu0 %v555, 32
  %v558 = vpop.permute.xlu0 %557
  %v560 = vsel %vm179, %v558, 0
  %562 = vmatprep.subr.bf16.mxu0 0
  %563 = vmatpush1.bf16.msra.mxu0 %v175
  %564 = vmatprep.subr.bf16.mxu0 0
  %565 = vmatpush1.bf16.msra.mxu0 %v176
  %566 = vmatprep.subr.bf16.mxu0 0
  %567 = vmatpush1.bf16.msra.mxu0 0
  %568 = vmatprep.subr.bf16.mxu0 0
  %569 = vmatpush1.bf16.msra.mxu0 0
  %570 = vmatprep.subr.bf16.mxu0 0
  %571 = vmatpush1.bf16.msra.mxu0 0
  %572 = vmatprep.subr.bf16.mxu0 0
  %573 = vmatpush1.bf16.msra.mxu0 0
  %574 = vmatprep.subr.bf16.mxu0 0
  %575 = vmatpush1.bf16.msra.mxu0 0
  %576 = vmatprep.subr.bf16.mxu0 0
  %577 = vmatpush1.bf16.msra.mxu0 0
  %578 = vmatprep.subr.bf16.mxu0 0
  %579 = vmatpush1.bf16.msra.mxu0 0
  %580 = vmatprep.subr.bf16.mxu0 0
  %581 = vmatpush1.bf16.msra.mxu0 0
  %582 = vmatprep.subr.bf16.mxu0 0
  %583 = vmatpush1.bf16.msra.mxu0 0
  %584 = vmatprep.subr.bf16.mxu0 0
  %585 = vmatpush1.bf16.msra.mxu0 0
  %586 = vmatprep.subr.bf16.mxu0 0
  %587 = vmatpush1.bf16.msra.mxu0 0
  %588 = vmatprep.subr.bf16.mxu0 0
  %589 = vmatpush1.bf16.msra.mxu0 0
  %590 = vmatprep.subr.bf16.mxu0 0
  %591 = vmatpush1.bf16.msra.mxu0 0
  %592 = vmatprep.subr.bf16.mxu0 0
  %593 = vmatpush1.bf16.msra.mxu0 0
  %594 = vmatprep.mubr.bf16.mxu0 0
  %595 = vmatmul.mubr.bf16.gmra.mrb[0].mxu0 %v560
  %v596 = vpop.f32.mrb[0].mxu0
  %v597 = vadd.f32 0.0, %v596
  %v598 = vpop.f32.mrb[0].mxu0
  %v599 = vpop.f32.mrb[0].mxu0
  %v600 = vpop.f32.mrb[0].mxu0
  %601 = vdwg.mxu0
  %v602 = vadd.f32 %v554, %v597
  %v603 = vxor.u32 %v602, 2147483648
  %v604 = vmul.f32 %v603, 1.442695
  %v605 = vpow.pop %v604
  %v606 = vadd.f32 %v605, 1.0
  %v607 = vrcp.pop %v606
  %v608 = vmul.f32 1.0, %v607
  %v609 = vmul.f32 %v608, 2.0
  %v610 = vsub.f32 %v609, 1.0
  %v611 = vmul.f32 %v608, %v546
  %613 = vrot.lane.b32.xlu0 %v610, 64
  %v614 = vpop.permute.xlu0 %613
  %v616 = vmul.f32 %v608, %v614
  %618 = vrot.lane.b32.xlu0 %v616, 32
  %v619 = vpop.permute.xlu0 %618
  %v621 = vadd.f32 %v611, %v619
  %v622 = vtanh.pop %v621
  %624 = vrot.lane.b32.xlu0 %v622, 64
  %v625 = vpop.permute.xlu0 %624
  %v627 = vmul.f32 %v608, %v625
  %s628 = scalar_lea.vmem [#allocation2], 48
  %v629 = vld [vmem:[%s628] sm:$0xff]
  %v630 = vpack.c.bf16 %v627, %v627
  %632 = vrot.lane.b32.xlu0 %v630, 32
  %v633 = vpop.permute.xlu0 %632
  %v635 = vsel %vm179, %v633, 0
  %637 = vmatprep.subr.bf16.mxu0 0
  %638 = vmatpush1.bf16.msra.mxu0 %v175
  %639 = vmatprep.subr.bf16.mxu0 0
  %640 = vmatpush1.bf16.msra.mxu0 %v176
  %641 = vmatprep.subr.bf16.mxu0 0
  %642 = vmatpush1.bf16.msra.mxu0 0
  %643 = vmatprep.subr.bf16.mxu0 0
  %644 = vmatpush1.bf16.msra.mxu0 0
  %645 = vmatprep.subr.bf16.mxu0 0
  %646 = vmatpush1.bf16.msra.mxu0 0
  %647 = vmatprep.subr.bf16.mxu0 0
  %648 = vmatpush1.bf16.msra.mxu0 0
  %649 = vmatprep.subr.bf16.mxu0 0
  %650 = vmatpush1.bf16.msra.mxu0 0
  %651 = vmatprep.subr.bf16.mxu0 0
  %652 = vmatpush1.bf16.msra.mxu0 0
  %653 = vmatprep.subr.bf16.mxu0 0
  %654 = vmatpush1.bf16.msra.mxu0 0
  %655 = vmatprep.subr.bf16.mxu0 0
  %656 = vmatpush1.bf16.msra.mxu0 0
  %657 = vmatprep.subr.bf16.mxu0 0
  %658 = vmatpush1.bf16.msra.mxu0 0
  %659 = vmatprep.subr.bf16.mxu0 0
  %660 = vmatpush1.bf16.msra.mxu0 0
  %661 = vmatprep.subr.bf16.mxu0 0
  %662 = vmatpush1.bf16.msra.mxu0 0
  %663 = vmatprep.subr.bf16.mxu0 0
  %664 = vmatpush1.bf16.msra.mxu0 0
  %665 = vmatprep.subr.bf16.mxu0 0
  %666 = vmatpush1.bf16.msra.mxu0 0
  %667 = vmatprep.subr.bf16.mxu0 0
  %668 = vmatpush1.bf16.msra.mxu0 0
  %669 = vmatprep.mubr.bf16.mxu0 0
  %670 = vmatmul.mubr.bf16.gmra.mrb[0].mxu0 %v635
  %v671 = vpop.f32.mrb[0].mxu0
  %v672 = vadd.f32 0.0, %v671
  %v673 = vpop.f32.mrb[0].mxu0
  %v674 = vpop.f32.mrb[0].mxu0
  %v675 = vpop.f32.mrb[0].mxu0
  %676 = vdwg.mxu0
  %v677 = vadd.f32 %v629, %v672
  %v678 = vxor.u32 %v677, 2147483648
  %v679 = vmul.f32 %v678, 1.442695
  %v680 = vpow.pop %v679
  %v681 = vadd.f32 %v680, 1.0
  %v682 = vrcp.pop %v681
  %v683 = vmul.f32 1.0, %v682
  %v684 = vmul.f32 %v683, 2.0
  %v685 = vsub.f32 %v684, 1.0
  %v686 = vmul.f32 %v683, %v621
  %688 = vrot.lane.b32.xlu0 %v685, 64
  %v689 = vpop.permute.xlu0 %688
  %v691 = vmul.f32 %v683, %v689
  %693 = vrot.lane.b32.xlu0 %v691, 32
  %v694 = vpop.permute.xlu0 %693
  %v696 = vadd.f32 %v686, %v694
  %v697 = vtanh.pop %v696
  %699 = vrot.lane.b32.xlu0 %v697, 64
  %v700 = vpop.permute.xlu0 %699
  %v702 = vmul.f32 %v683, %v700
  %s703 = scalar_lea.vmem [#allocation2], 56
  %v704 = vld [vmem:[%s703] sm:$0xff]
  %v705 = vpack.c.bf16 %v702, %v702
  %707 = vrot.lane.b32.xlu0 %v705, 32
  %v708 = vpop.permute.xlu0 %707
  %v710 = vsel %vm179, %v708, 0
  %712 = vmatprep.subr.bf16.mxu0 0
  %713 = vmatpush1.bf16.msra.mxu0 %v175
  %714 = vmatprep.subr.bf16.mxu0 0
  %715 = vmatpush1.bf16.msra.mxu0 %v176
  %716 = vmatprep.subr.bf16.mxu0 0
  %717 = vmatpush1.bf16.msra.mxu0 0
  %718 = vmatprep.subr.bf16.mxu0 0
  %719 = vmatpush1.bf16.msra.mxu0 0
  %720 = vmatprep.subr.bf16.mxu0 0
  %721 = vmatpush1.bf16.msra.mxu0 0
  %722 = vmatprep.subr.bf16.mxu0 0
  %723 = vmatpush1.bf16.msra.mxu0 0
  %724 = vmatprep.subr.bf16.mxu0 0
  %725 = vmatpush1.bf16.msra.mxu0 0
  %726 = vmatprep.subr.bf16.mxu0 0
  %727 = vmatpush1.bf16.msra.mxu0 0
  %728 = vmatprep.subr.bf16.mxu0 0
  %729 = vmatpush1.bf16.msra.mxu0 0
  %730 = vmatprep.subr.bf16.mxu0 0
  %731 = vmatpush1.bf16.msra.mxu0 0
  %732 = vmatprep.subr.bf16.mxu0 0
  %733 = vmatpush1.bf16.msra.mxu0 0
  %734 = vmatprep.subr.bf16.mxu0 0
  %735 = vmatpush1.bf16.msra.mxu0 0
  %736 = vmatprep.subr.bf16.mxu0 0
  %737 = vmatpush1.bf16.msra.mxu0 0
  %738 = vmatprep.subr.bf16.mxu0 0
  %739 = vmatpush1.bf16.msra.mxu0 0
  %740 = vmatprep.subr.bf16.mxu0 0
  %741 = vmatpush1.bf16.msra.mxu0 0
  %742 = vmatprep.subr.bf16.mxu0 0
  %743 = vmatpush1.bf16.msra.mxu0 0
  %744 = vmatprep.mubr.bf16.mxu0 0
  %745 = vmatmul.mubr.bf16.gmra.mrb[0].mxu0 %v710
  %v746 = vpop.f32.mrb[0].mxu0
  %v747 = vadd.f32 0.0, %v746
  %v748 = vpop.f32.mrb[0].mxu0
  %v749 = vpop.f32.mrb[0].mxu0
  %v750 = vpop.f32.mrb[0].mxu0
  %751 = vdwg.mxu0
  %v752 = vadd.f32 %v704, %v747
  %v753 = vxor.u32 %v752, 2147483648
  %v754 = vmul.f32 %v753, 1.442695
  %v755 = vpow.pop %v754
  %v756 = vadd.f32 %v755, 1.0
  %v757 = vrcp.pop %v756
  %v758 = vmul.f32 1.0, %v757
  %v759 = vmul.f32 %v758, 2.0
  %v760 = vsub.f32 %v759, 1.0
  %v761 = vmul.f32 %v758, %v696
  %763 = vrot.lane.b32.xlu0 %v760, 64
  %v764 = vpop.permute.xlu0 %763
  %v766 = vmul.f32 %v758, %v764
  %768 = vrot.lane.b32.xlu0 %v766, 32
  %v769 = vpop.permute.xlu0 %768
  %v771 = vadd.f32 %v761, %v769
  %v772 = vtanh.pop %v771
  %774 = vrot.lane.b32.xlu0 %v772, 64
  %v775 = vpop.permute.xlu0 %774
  %v777 = vmul.f32 %v758, %v775
  %779 = vrot.lane.b32.xlu0 %v777, 32
  %v780 = vpop.permute.xlu0 %779
  %782 = vst.msk [vmem:[#allocation3] sm:$0xff] %vm179, %v780
  %784 = vrot.lane.b32.xlu0 %v771, 96
  %v785 = vpop.permute.xlu0 %784
  %787 = vst.msk [vmem:[#allocation4] sm:$0xff] %vm179, %v785
  // Predicated region
  $region30: #{tpu_custom_call.1} parent=0 // pred_check
    %p788 = pneg %p26
  $region31: #{tpu_custom_call.1} parent=0 // pred_check_branch
    %790 = sbr.rel (%p788) target = $region33
  $region32: #{tpu_custom_call.1} parent=0 // pred_region
    %v791 = vld [vmem:[%s4] sm:$0xff]
    %v792 = vld [vmem:[%s4 + $0x8] sm:$0xff]
    %v793 = vld [vmem:[%s4 + $0x10] sm:$0xff]
    %v794 = vld [vmem:[%s4 + $0x18] sm:$0xff]
    %v795 = vld [vmem:[#allocation5] sm:$0x1]
    %v797 = vlaneseq
    %v798 = vshrl.u32 %v797, 7
    %v799 = vsub.s32 0, %v798
    %v800 = vrot.slane %v795, %v799
    %v802 = vsel %vm179, %v780, 0
    %804 = vmatprep.subr.mxu0 0.0
    %805 = vmatpush1.msra.mxu0 %v791
    %806 = vmatprep.subr.mxu0 0.0
    %807 = vmatpush1.msra.mxu0 %v792
    %808 = vmatprep.subr.mxu0 0.0
    %809 = vmatpush1.msra.mxu0 %v793
    %810 = vmatprep.subr.mxu0 0.0
    %811 = vmatpush1.msra.mxu0 %v794
    %812 = vmatprep.subr.mxu0 0.0
    %813 = vmatpush1.msra.mxu0 0.0
    %814 = vmatprep.subr.mxu0 0.0
    %815 = vmatpush1.msra.mxu0 0.0
    %816 = vmatprep.subr.mxu0 0.0
    %817 = vmatpush1.msra.mxu0 0.0
    %818 = vmatprep.subr.mxu0 0.0
    %819 = vmatpush1.msra.mxu0 0.0
    %820 = vmatprep.subr.mxu0 0.0
    %821 = vmatpush1.msra.mxu0 0.0
    %822 = vmatprep.subr.mxu0 0.0
    %823 = vmatpush1.msra.mxu0 0.0
    %824 = vmatprep.subr.mxu0 0.0
    %825 = vmatpush1.msra.mxu0 0.0
    %826 = vmatprep.subr.mxu0 0.0
    %827 = vmatpush1.msra.mxu0 0.0
    %828 = vmatprep.subr.mxu0 0.0
    %829 = vmatpush1.msra.mxu0 0.0
    %830 = vmatprep.subr.mxu0 0.0
    %831 = vmatpush1.msra.mxu0 0.0
    %832 = vmatprep.subr.mxu0 0.0
    %833 = vmatpush1.msra.mxu0 0.0
    %834 = vmatprep.subr.mxu0 0.0
    %835 = vmatpush1.msra.mxu0 0.0
    %836 = vmatprep.subr.mxu0 0.0
    %837 = vmatpush1.msra.mxu0 0.0
    %838 = vmatprep.subr.mxu0 0.0
    %839 = vmatpush1.msra.mxu0 0.0
    %840 = vmatprep.subr.mxu0 0.0
    %841 = vmatpush1.msra.mxu0 0.0
    %842 = vmatprep.subr.mxu0 0.0
    %843 = vmatpush1.msra.mxu0 0.0
    %844 = vmatprep.subr.mxu0 0.0
    %845 = vmatpush1.msra.mxu0 0.0
    %846 = vmatprep.subr.mxu0 0.0
    %847 = vmatpush1.msra.mxu0 0.0
    %848 = vmatprep.subr.mxu0 0.0
    %849 = vmatpush1.msra.mxu0 0.0
    %850 = vmatprep.subr.mxu0 0.0
    %851 = vmatpush1.msra.mxu0 0.0
    %852 = vmatprep.subr.mxu0 0.0
    %853 = vmatpush1.msra.mxu0 0.0
    %854 = vmatprep.subr.mxu0 0.0
    %855 = vmatpush1.msra.mxu0 0.0
    %856 = vmatprep.subr.mxu0 0.0
    %857 = vmatpush1.msra.mxu0 0.0
    %858 = vmatprep.subr.mxu0 0.0
    %859 = vmatpush1.msra.mxu0 0.0
    %860 = vmatprep.subr.mxu0 0.0
    %861 = vmatpush1.msra.mxu0 0.0
    %862 = vmatprep.subr.mxu0 0.0
    %863 = vmatpush1.msra.mxu0 0.0
    %864 = vmatprep.subr.mxu0 0.0
    %865 = vmatpush1.msra.mxu0 0.0
    %866 = vmatprep.subr.mxu0 0.0
    %867 = vmatpush1.msra.mxu0 0.0
    %868 = vmatprep.mubr.f32.mxu0 0.0
    %869 = vmatmul.mubr.f32.gmra.mrb[0].mxu0 %v802
    %v870 = vpop.f32.mrb[0].mxu0
    %v871 = vadd.f32 %v800, %v870
    %v872 = vpop.f32.mrb[0].mxu0
    %873 = vdwg.mxu0
    %vm874 = vcmask 7168
    %875 = vst.msk [vmem:[%s6] sm:$0xff] %vm874, %v871
  $region33: #{tpu_custom_call.1} parent=0 // pred_fallthru
    _
  // Predicated region
  $region34: #{tpu_custom_call.1} parent=0 // pred_check
    _
  $region35: #{tpu_custom_call.1} parent=0 // pred_check_branch
    %877 = sbr.rel (0) target = $region37
  $region36: #{tpu_custom_call.1} parent=0 // pred_region
    _
  $region37: #{tpu_custom_call.1} parent=0 // pred_fallthru
    _
  // Predicated region
  $region38: #{tpu_custom_call.1} parent=0 // pred_check
    _
  $region39: #{tpu_custom_call.1} parent=0 // pred_check_branch
    %879 = sbr.rel (0) target = $region41
  $region40: #{tpu_custom_call.1} parent=0 // pred_region
    _
  $region41: #{tpu_custom_call.1} parent=0 // pred_fallthru
    _

</llo_original>
